<compile_context>
chip_gen: v7x
topology: tpu7x:2x2x1
jax: 0.10.0
libtpu: 0.0.40
codegen_flags: <defaults>
</compile_context>

<pallas_src>
import jax
import jax.numpy as jnp
from jax.experimental import pallas as pl
from jax.experimental.pallas import tpu as pltpu


def _nsp_head_kernel(x_ref, w_ref, b_ref, out_ref):
    # x_ref: (TM, H); w_ref: (N, H); b_ref: (1, N); out_ref: (TM, N), N == 2.
    tm, n = out_ref.shape
    x = x_ref[...].astype(jnp.float32)            # (TM, H)
    w = w_ref[...].astype(jnp.float32)            # (N,  H)

    # score_j = sum_h x[m, h] * w[j, h]  — VPU multiply + cross-lane reduction.
    # Assemble the (TM, 2) result purely with elementwise selects (no MXU, no
    # lane padding, no concat): column j gets s_j.
    lane = jax.lax.broadcasted_iota(jnp.int32, (tm, n), 1)
    scores = jnp.zeros((tm, n), jnp.float32)
    for j in range(n):  # n == 2, static unroll
        s_j = jnp.sum(x * w[j, :][None, :], axis=-1, keepdims=True)  # (TM, 1)
        scores = jnp.where(lane == j, s_j, scores)

    scores = scores + b_ref[...].astype(jnp.float32)
    out_ref[...] = scores.astype(out_ref.dtype)


def prepare_nsp_head_params(weight, bias):
    """One-time prep of the nn.Linear(hidden_size, 2) params into kernel layout.

    weight: (N=2, H) torch Linear layout; bias: (N,).
    Call once at parameter-load time, NOT per forward (perf-review item 1):
    the kernel consumes the weight un-padded and un-transposed.
    """
    n, h = weight.shape
    assert bias.shape == (n,)
    return weight, bias.reshape(1, n)


def _pick_tile_m(batch, dtype):
    # Minimum well-formed row block: 8 rows for 32-bit, 16 for bf16 (two rows
    # pack per sublane), 32 for 8-bit.
    min_rows = max(8, 32 // jnp.dtype(dtype).itemsize)
    # Keep the grid >= 2 steps when the batch allows it, so the "parallel"
    # grid axis can be sharded across v7x's two TensorCores.
    cap = batch // 2 if batch >= 2 * min_rows else batch
    for cand in (512, 256, 128, 64, 32, 16, 8):
        if cand < min_rows:
            continue
        if cand <= cap and batch % cand == 0:
            return cand
    return batch  # full-extent single block (legal regardless of divisibility)


def bert_only_nsp_head(pooled_output, w_kernel, b_kernel, *, tile_m=None):
    """pooled_output: (B, H); (w_kernel, b_kernel) from prepare_nsp_head_params.

    Returns seq_relationship_score: (B, 2) in pooled_output.dtype.
    """
    B, H = pooled_output.shape
    N = w_kernel.shape[0]
    assert w_kernel.shape == (N, H) and b_kernel.shape == (1, N)

    if tile_m is None:
        tile_m = _pick_tile_m(B, pooled_output.dtype)
    assert B % tile_m == 0, "tile_m must evenly divide the batch dimension"
    grid = (B // tile_m,)

    itemsize = int(jnp.dtype(pooled_output.dtype).itemsize)
    cost = pl.CostEstimate(
        flops=2 * B * H * N,
        transcendentals=0,
        bytes_accessed=int((B * H + N * H) * itemsize + N * 4 + B * N * itemsize),
    )

    return pl.pallas_call(
        _nsp_head_kernel,
        out_shape=jax.ShapeDtypeStruct((B, N), pooled_output.dtype),
        grid_spec=pltpu.PrefetchScalarGridSpec(
            num_scalar_prefetch=0,
            grid=grid,
            in_specs=[
                pl.BlockSpec((tile_m, H), lambda i: (i, 0)),  # activation row tile
                pl.BlockSpec((N, H), lambda i: (0, 0)),       # weight: VMEM-resident
                pl.BlockSpec((1, N), lambda i: (0, 0)),       # bias:   VMEM-resident
            ],
            out_specs=pl.BlockSpec((tile_m, N), lambda i: (i, 0)),
        ),
        compiler_params=pltpu.CompilerParams(
            dimension_semantics=("parallel",),  # shard row tiles across TCs (v7x)
        ),
        cost_estimate=cost,
    )(pooled_output, w_kernel, b_kernel)


if __name__ == "__main__":
    # Small synthetic config consistent with the module: batch=8, hidden=32, 2 classes.
    B, H, N = 8, 32, 2
    key = jax.random.PRNGKey(0)
    k0, k1, k2 = jax.random.split(key, 3)

    pooled_output = jax.random.normal(k0, (B, H), jnp.float32)
    weight = jax.random.normal(k1, (N, H), jnp.float32) * 0.05  # torch Linear (out, in)
    bias = jax.random.normal(k2, (N,), jnp.float32) * 0.02

    # Parameter prep happens once, outside the hot forward path.
    w_kernel, b_kernel = prepare_nsp_head_params(weight, bias)

    out = bert_only_nsp_head(pooled_output, w_kernel, b_kernel)
    out = jax.block_until_ready(out)

    ref = pooled_output @ weight.T + bias
    assert out.shape == (B, N)
    assert jnp.allclose(out, ref, atol=1e-5, rtol=1e-5), "mismatch vs reference"

    print("KERNEL_OK")
</pallas_src>

<mosaic_0001>
module attributes {stable_mosaic.version = 11 : i64} {
  func.func @_nsp_head_kernel(%arg0: i32, %arg1: memref<8x32xf32, #tpu.memory_space<vmem>>, %arg2: memref<2x32xf32, #tpu.memory_space<vmem>>, %arg3: memref<1x2xf32, #tpu.memory_space<vmem>>, %arg4: memref<8x2xf32, #tpu.memory_space<vmem>>) attributes {dimension_semantics = [#tpu.dimension_semantics<parallel>], iteration_bounds = array<i64: 1>, scalar_prefetch = 0 : i64, scratch_operands = 0 : i64, tpu.core_type = #tpu.core_type<tc>, window_params = [{transform_indices = @transform_0, window_bounds = array<i64: 8, 32>}, {pipeline_mode = #tpu.pipeline_mode<synchronous>, transform_indices = @transform_1, window_bounds = array<i64: 2, 32>}, {pipeline_mode = #tpu.pipeline_mode<synchronous>, transform_indices = @transform_2, window_bounds = array<i64: 1, 2>}, {transform_indices = @transform_3, window_bounds = array<i64: 8, 2>}]} {
    %c0 = arith.constant 0 : index
    %c0_0 = arith.constant 0 : index
    %0 = vector.load %arg1[%c0, %c0_0] : memref<8x32xf32, #tpu.memory_space<vmem>>, vector<8x32xf32>
    %c0_1 = arith.constant 0 : index
    %c0_2 = arith.constant 0 : index
    %1 = vector.load %arg2[%c0_1, %c0_2] : memref<2x32xf32, #tpu.memory_space<vmem>>, vector<2x32xf32>
    %2 = tpu.iota {dimensions = array<i32: 1>} : vector<8x2xi32>
    %cst = arith.constant 0.000000e+00 : f32
    %3 = vector.broadcast %cst : f32 to vector<8x2xf32>
    %4 = vector.extract_strided_slice %1 {offsets = [0, 0], sizes = [1, 32], strides = [1, 1]} : vector<2x32xf32> to vector<1x32xf32>
    %5 = vector.shape_cast %4 : vector<1x32xf32> to vector<32xf32>
    %6 = vector.shape_cast %5 : vector<32xf32> to vector<1x32xf32>
    %7 = vector.broadcast %6 : vector<1x32xf32> to vector<8x32xf32>
    %8 = arith.mulf %0, %7 : vector<8x32xf32>
    %cst_3 = arith.constant dense<0.000000e+00> : vector<8xf32>
    %9 = vector.multi_reduction <add>, %8, %cst_3 [1] : vector<8x32xf32> to vector<8xf32>
    %10 = vector.shape_cast %9 : vector<8xf32> to vector<8x1xf32>
    %c0_i32 = arith.constant 0 : i32
    %11 = vector.broadcast %c0_i32 : i32 to vector<8x2xi32>
    %12 = arith.cmpi eq, %2, %11 : vector<8x2xi32>
    %13 = vector.shape_cast %10 : vector<8x1xf32> to vector<8x1xf32>
    %14 = vector.broadcast %13 : vector<8x1xf32> to vector<8x2xf32>
    %15 = arith.select %12, %14, %3 : vector<8x2xi1>, vector<8x2xf32>
    %16 = vector.extract_strided_slice %1 {offsets = [1, 0], sizes = [1, 32], strides = [1, 1]} : vector<2x32xf32> to vector<1x32xf32>
    %17 = vector.shape_cast %16 : vector<1x32xf32> to vector<32xf32>
    %18 = vector.shape_cast %17 : vector<32xf32> to vector<1x32xf32>
    %19 = vector.broadcast %18 : vector<1x32xf32> to vector<8x32xf32>
    %20 = arith.mulf %0, %19 : vector<8x32xf32>
    %cst_4 = arith.constant dense<0.000000e+00> : vector<8xf32>
    %21 = vector.multi_reduction <add>, %20, %cst_4 [1] : vector<8x32xf32> to vector<8xf32>
    %22 = vector.shape_cast %21 : vector<8xf32> to vector<8x1xf32>
    %c1_i32 = arith.constant 1 : i32
    %23 = vector.broadcast %c1_i32 : i32 to vector<8x2xi32>
    %24 = arith.cmpi eq, %2, %23 : vector<8x2xi32>
    %25 = vector.shape_cast %22 : vector<8x1xf32> to vector<8x1xf32>
    %26 = vector.broadcast %25 : vector<8x1xf32> to vector<8x2xf32>
    %27 = arith.select %24, %26, %15 : vector<8x2xi1>, vector<8x2xf32>
    %c0_5 = arith.constant 0 : index
    %c0_6 = arith.constant 0 : index
    %28 = vector.load %arg3[%c0_5, %c0_6] : memref<1x2xf32, #tpu.memory_space<vmem>>, vector<1x2xf32>
    %29 = vector.broadcast %28 : vector<1x2xf32> to vector<8x2xf32>
    %30 = arith.addf %27, %29 : vector<8x2xf32>
    %c0_7 = arith.constant 0 : index
    %c0_8 = arith.constant 0 : index
    %31 = vector.load %arg4[%c0_7, %c0_8] : memref<8x2xf32, #tpu.memory_space<vmem>>, vector<8x2xf32>
    tpu.vector_store %arg4[%c0_7, %c0_8], %30 {strides = array<i32>} : memref<8x2xf32, #tpu.memory_space<vmem>>, vector<8x2xf32>,
    return
  }
  func.func @transform_0(%arg0: i32) -> (i32, i32) {
    %c0_i32 = arith.constant 0 : i32
    %c0_i32_0 = arith.constant 0 : i32
    return %arg0, %c0_i32 : i32, i32
  }
  func.func @transform_1(%arg0: i32) -> (i32, i32) {
    %c0_i32 = arith.constant 0 : i32
    %c0_i32_0 = arith.constant 0 : i32
    %c0_i32_1 = arith.constant 0 : i32
    return %c0_i32, %c0_i32_0 : i32, i32
  }
  func.func @transform_2(%arg0: i32) -> (i32, i32) {
    %c0_i32 = arith.constant 0 : i32
    %c0_i32_0 = arith.constant 0 : i32
    %c0_i32_1 = arith.constant 0 : i32
    return %c0_i32, %c0_i32_0 : i32, i32
  }
  func.func @transform_3(%arg0: i32) -> (i32, i32) {
    %c0_i32 = arith.constant 0 : i32
    %c0_i32_0 = arith.constant 0 : i32
    return %arg0, %c0_i32 : i32, i32
  }
}

</mosaic_0001>

<llo_original>
// kernel: tpu_custom_call.1
$region0: #{tpu_custom_call.1}
  #allocation0 [shape = 'u32[]', space=smem, size = 0x4, offset = 0x4, fixed_abs, tag = 'smem constant byte address 0x4 - core index']
  #allocation1 [shape = 'u32[144,128]{1,0:T(1,128)}', space=vmem, size = 0x12000, scoped, tag = 'internal scratch']
  %s0 = inlined_call_operand.hbm [shape: f32[8,32], index: 0, kind: input, shape index: {}]
  %s1 = inlined_call_operand.vmem [shape: f32[2,32], index: 1, kind: input, shape index: {}]
  %s2 = inlined_call_operand.vmem [shape: f32[1,2], index: 2, kind: input, shape index: {}]
  %s3 = inlined_call_operand.vmem [shape: f32[8,2], index: 3, kind: output, shape index: {}]
  %s4 = sld [smem:[#allocation0]]
  $region26: #{tpu_custom_call.1} parent=0
    _
  %s6 = ssub.s32 1, %s4
  %s7 = scalar_select 0, %s6, %s4
  $region1: #{tpu_custom_call.1} parent=0
    #allocation2 [shape = 'u8[4096]{0}', space=vmem, size = 0x1000, scoped, tag = 'input window, operand 0, single buffered']
    #allocation3 [shape = 's32[1]{0}', space=sflag, size = 0x4, scoped, tag = 'scoped memory for tpu_custom_call.1']
    %8 = vsyncpa [#allocation3], 0
    // Predicated region
    $region2: #{tpu_custom_call.1} parent=1 // pred_check
      _
    $region3: #{tpu_custom_call.1} parent=1 // pred_check_branch
      %10 = sbr.rel (0) target = $region5
    $region4: #{tpu_custom_call.1} parent=1 // pred_region
      %s12 = ssub.s32 128, 128
      %13 = vsyncadd [#allocation3], %s12
      %s15 = sshll.u32 [#allocation2], 4
      %s16 = int_to_ptr.vmem [resolvable:$true] %s15
      %18 = dma.hbm_to_vmem [thread:$0]  %s0, 128, %s16, [#allocation3]
    $region5: #{tpu_custom_call.1} parent=1 // pred_fallthru
      _
    // Predicated region
    $region6: #{tpu_custom_call.1} parent=1 // pred_check
      _
    $region7: #{tpu_custom_call.1} parent=1 // pred_check_branch
      %20 = sbr.rel (0) target = $region9
    $region8: #{tpu_custom_call.1} parent=1 // pred_region
      _
    $region9: #{tpu_custom_call.1} parent=1 // pred_fallthru
      _
    // Predicated region
    $region10: #{tpu_custom_call.1} parent=1 // pred_check
      _
    $region11: #{tpu_custom_call.1} parent=1 // pred_check_branch
      %22 = sbr.rel (0) target = $region13
    $region12: #{tpu_custom_call.1} parent=1 // pred_region
      _
    $region13: #{tpu_custom_call.1} parent=1 // pred_fallthru
      _
    // Predicated region
    $region14: #{tpu_custom_call.1} parent=1 // pred_check
      _
    $region15: #{tpu_custom_call.1} parent=1 // pred_check_branch
      %24 = sbr.rel (0) target = $region17
    $region16: #{tpu_custom_call.1} parent=1 // pred_region
      %25 = dma.done [#allocation3], 128
    $region17: #{tpu_custom_call.1} parent=1 // pred_fallthru
      _
    %v26 = vld [vmem:[#allocation2] sm:$0xff]
    %v27 = vld [vmem:[%s1] sm:$0x3]
    %v28 = vlaneseq
    %v29 = vand.u32 %v28, 127
    %v30 = vlaneseq
    %v31 = vshrl.u32 %v30, 7
    %v32 = vsub.s32 0, %v31
    %v33 = vrot.slane %v27, %v32
    %v34 = vmul.f32 %v26, %v33
    %vm35 = vcmask 261120
    %v36 = vsel %vm35, %v34, 0.0
    %37 = vadd.xlane.f32.xlu0 %v36
    %v38 = vpop.xlane.xlu0 %37
    %vm39 = vcmp.eq.s32.totalorder %v29, 0
    %v40 = vsel %vm39, %v38, 0.0
    %v41 = vlaneseq
    %v42 = vshrl.u32 %v41, 7
    %v43 = vsub.s32 1, %v42
    %v44 = vrot.slane %v27, %v43
    %v45 = vmul.f32 %v26, %v44
    %v46 = vsel %vm35, %v45, 0.0
    %47 = vadd.xlane.f32.xlu0 %v46
    %v48 = vpop.xlane.xlu0 %47
    %vm49 = vcmp.eq.s32.totalorder %v29, 1
    %v50 = vsel %vm49, %v48, %v40
    %v51 = vld [vmem:[%s2] sm:$0x1]
    %v53 = vlaneseq
    %v54 = vshrl.u32 %v53, 7
    %v55 = vsub.s32 0, %v54
    %v56 = vrot.slane %v51, %v55
    %v58 = vadd.f32 %v50, %v56
    %vm59 = vcmask 15360
    %60 = vst.msk [vmem:[%s3] sm:$0xff] %vm59, %v58
    // Predicated region
    $region18: #{tpu_custom_call.1} parent=1 // pred_check
      _
    $region19: #{tpu_custom_call.1} parent=1 // pred_check_branch
      %62 = sbr.rel (0) target = $region21
    $region20: #{tpu_custom_call.1} parent=1 // pred_region
      _
    $region21: #{tpu_custom_call.1} parent=1 // pred_fallthru
      _
    // Predicated region
    $region22: #{tpu_custom_call.1} parent=1 // pred_check
      _
    $region23: #{tpu_custom_call.1} parent=1 // pred_check_branch
      %64 = sbr.rel (0) target = $region25
    $region24: #{tpu_custom_call.1} parent=1 // pred_region
      _
    $region25: #{tpu_custom_call.1} parent=1 // pred_fallthru
      _
    %65 = vsyncpa [#allocation3], 1

</llo_original>
